<compile_context>
chip_gen: v5e
topology: v5e:2x2
jax: 0.10.0
libtpu: 0.0.40
codegen_flags: <defaults>
</compile_context>

<pallas_src>
import jax
import jax.numpy as jnp
from jax.experimental import pallas as pl
from jax.experimental.pallas import tpu as pltpu


def _round_up(a, b):
    return (a + b - 1) // b * b


def _triangle_sdf_kernel(consts_ref, x_ref, o_ref):
    # consts_ref: SMEM (4,) f32 = [ns0, ns1, ns2, c]   (scalar prefetch)
    # x_ref:      VMEM (3, tile_n)  SoA points
    # o_ref:      VMEM (1, tile_n)
    ns0 = consts_ref[0]
    ns1 = consts_ref[1]
    ns2 = consts_ref[2]
    c = consts_ref[3]
    x0 = x_ref[0:1, :]          # (1, tile_n)  pure lane-dense VPU code
    x1 = x_ref[1:2, :]
    x2 = x_ref[2:3, :]
    o_ref[...] = jnp.sqrt(x0 * ns0 + x1 * ns1 + x2 * ns2 - c)


def triangle_sdf_soa(x_t, v1, v2, v3, *, tile_n=131072):
    """x_t: (3, N) float32 points (SoA); v1, v2, v3: (3,) vertices.

    Returns (N, 1) float32 = sqrt(dot(x - v1, n) / dot(n, n)).
    Preferred entry point (no input transpose -> pure HBM-roofline streaming).
    """
    x_t = jnp.asarray(x_t, jnp.float32)
    v1 = jnp.asarray(v1, jnp.float32)
    v2 = jnp.asarray(v2, jnp.float32)
    v3 = jnp.asarray(v3, jnp.float32)

    # Parameter setup (glue): triangle normal + folded constants.
    n = jnp.cross(v2 - v1, v3 - v2)                    # (3,)
    den = jnp.dot(n, n)                                # dot(n, n)
    n_s = n / den                                      # n / dot(n, n)
    c = jnp.dot(v1, n_s)                               # dot(v1, n) / dot(n, n)
    consts = jnp.concatenate([n_s, c[None]]).astype(jnp.float32)   # (4,)

    N = x_t.shape[1]

    # Tile selection: lane-dense, multiple of 128, capped so the
    # double-buffered working set (~128 B/lane incl. sublane padding)
    # stays well inside the 32 MiB default scoped VMEM on every generation.
    n128 = _round_up(N, 128)
    tile = _round_up(min(int(tile_n), n128), 128)
    if tile >= n128 and n128 >= 2 * 128:
        # Single-tile problem: split in two so the "parallel" axis can shard
        # across v7x's two TensorCores (harmless on v5e/v6e).
        tile = _round_up(pl.cdiv(n128, 2), 128)

    n_pad = _round_up(N, tile)
    if n_pad != N:
        x_t = jnp.pad(x_t, ((0, 0), (0, n_pad - N)))

    grid = (n_pad // tile,)

    out = pl.pallas_call(
        _triangle_sdf_kernel,
        out_shape=jax.ShapeDtypeStruct((1, n_pad), jnp.float32),
        grid_spec=pltpu.PrefetchScalarGridSpec(
            num_scalar_prefetch=1,                        # consts -> SMEM
            grid=grid,
            in_specs=[pl.BlockSpec((3, tile), lambda i, consts: (0, i))],
            out_specs=pl.BlockSpec((1, tile), lambda i, consts: (0, i)),
        ),
        compiler_params=pltpu.CompilerParams(
            dimension_semantics=("parallel",)),
    )(consts, x_t)

    return out[:, :N].reshape(N, 1)


def triangle_sdf(x, v1, v2, v3, *, tile_n=131072):
    """x: (N, 3) float32 points (PyTorch AoS convention). Returns (N, 1).

    NOTE: for this bandwidth-bound kernel the (N,3)->(3,N) transpose is a
    separate XLA pass that can cost more HBM traffic than the kernel itself.
    Callers that already hold points SoA should use triangle_sdf_soa directly.
    """
    x = jnp.asarray(x, jnp.float32)
    return triangle_sdf_soa(x.T, v1, v2, v3, tile_n=tile_n)


def _reference(x, v1, v2, v3):
    n = jnp.cross(v2 - v1, v3 - v2)
    num = jnp.sum((x - v1[None, :]) * n[None, :], axis=-1, keepdims=True)
    den = jnp.sum(n * n)
    return jnp.sqrt(num / den)


if __name__ == "__main__":
    key = jax.random.PRNGKey(0)
    k1, k2, k3, kx = jax.random.split(key, 4)

    # Deterministic triangle vertices (module parameters).
    v1 = jax.random.normal(k1, (3,), jnp.float32)
    v2 = jax.random.normal(k2, (3,), jnp.float32)
    v3 = jax.random.normal(k3, (3,), jnp.float32)

    # Query points; ragged N exercises the padded last tile.  Shift well onto
    # the +normal side so the sqrt argument stays comfortably positive (NaNs
    # on the negative side would match the PyTorch semantics either way).
    N = 1000
    n = jnp.cross(v2 - v1, v3 - v2)
    n_hat = n / jnp.linalg.norm(n)
    x = jax.random.normal(kx, (N, 3), jnp.float32) + v1[None, :] + 5.0 * n_hat[None, :]

    out = jax.block_until_ready(triangle_sdf(x, v1, v2, v3))
    ref = _reference(x, v1, v2, v3)

    assert out.shape == (N, 1)
    finite = jnp.isfinite(ref)
    ok_vals = bool(jnp.allclose(jnp.where(finite, out, 0.0),
                                jnp.where(finite, ref, 0.0),
                                atol=1e-4, rtol=1e-4))
    ok_nans = bool(jnp.all(jnp.isnan(out) == jnp.isnan(ref)))
    assert ok_vals and ok_nans

    print("KERNEL_OK")
</pallas_src>

<mosaic_0001>
module attributes {stable_mosaic.version = 11 : i64} {
  func.func @_triangle_sdf_kernel(%arg0: i32, %arg1: memref<4xf32, #tpu.memory_space<smem>>, %arg2: memref<3x512xf32, #tpu.memory_space<vmem>>, %arg3: memref<1x512xf32, #tpu.memory_space<vmem>>) attributes {dimension_semantics = [#tpu.dimension_semantics<parallel>], iteration_bounds = array<i64: 2>, scalar_prefetch = 1 : i64, scratch_operands = 0 : i64, tpu.core_type = #tpu.core_type<tc>, window_params = [{transform_indices = @transform_0, window_bounds = array<i64: 3, 512>}, {transform_indices = @transform_1, window_bounds = array<i64: 1, 512>}]} {
    %c0 = arith.constant 0 : index
    %0 = memref.load %arg1[%c0] : memref<4xf32, #tpu.memory_space<smem>>
    %c1 = arith.constant 1 : index
    %1 = memref.load %arg1[%c1] : memref<4xf32, #tpu.memory_space<smem>>
    %c2 = arith.constant 2 : index
    %2 = memref.load %arg1[%c2] : memref<4xf32, #tpu.memory_space<smem>>
    %c3 = arith.constant 3 : index
    %3 = memref.load %arg1[%c3] : memref<4xf32, #tpu.memory_space<smem>>
    %c0_0 = arith.constant 0 : index
    %c0_1 = arith.constant 0 : index
    %4 = vector.load %arg2[%c0_0, %c0_1] : memref<3x512xf32, #tpu.memory_space<vmem>>, vector<1x512xf32>
    %c1_2 = arith.constant 1 : index
    %c0_3 = arith.constant 0 : index
    %5 = vector.load %arg2[%c1_2, %c0_3] : memref<3x512xf32, #tpu.memory_space<vmem>>, vector<1x512xf32>
    %c2_4 = arith.constant 2 : index
    %c0_5 = arith.constant 0 : index
    %6 = vector.load %arg2[%c2_4, %c0_5] : memref<3x512xf32, #tpu.memory_space<vmem>>, vector<1x512xf32>
    %7 = vector.broadcast %0 : f32 to vector<1x512xf32>
    %8 = arith.mulf %4, %7 : vector<1x512xf32>
    %9 = vector.broadcast %1 : f32 to vector<1x512xf32>
    %10 = arith.mulf %5, %9 : vector<1x512xf32>
    %11 = arith.addf %8, %10 : vector<1x512xf32>
    %12 = vector.broadcast %2 : f32 to vector<1x512xf32>
    %13 = arith.mulf %6, %12 : vector<1x512xf32>
    %14 = arith.addf %11, %13 : vector<1x512xf32>
    %15 = vector.broadcast %3 : f32 to vector<1x512xf32>
    %16 = arith.subf %14, %15 : vector<1x512xf32>
    %17 = math.sqrt %16 : vector<1x512xf32>
    %c0_6 = arith.constant 0 : index
    %c0_7 = arith.constant 0 : index
    %18 = vector.load %arg3[%c0_6, %c0_7] : memref<1x512xf32, #tpu.memory_space<vmem>>, vector<1x512xf32>
    tpu.vector_store %arg3[%c0_6, %c0_7], %17 {strides = array<i32>} : memref<1x512xf32, #tpu.memory_space<vmem>>, vector<1x512xf32>,
    return
  }
  func.func @transform_0(%arg0: i32, %arg1: memref<4xf32, #tpu.memory_space<smem>>) -> (i32, i32) {
    %c0_i32 = arith.constant 0 : i32
    %c0_i32_0 = arith.constant 0 : i32
    return %c0_i32, %arg0 : i32, i32
  }
  func.func @transform_1(%arg0: i32, %arg1: memref<4xf32, #tpu.memory_space<smem>>) -> (i32, i32) {
    %c0_i32 = arith.constant 0 : i32
    %c0_i32_0 = arith.constant 0 : i32
    return %c0_i32, %arg0 : i32, i32
  }
}

</mosaic_0001>

<llo_original>
// kernel: tpu_custom_call.1
$region0: #{tpu_custom_call.1}
  #allocation0 [shape = 'u32[]', space=smem, size = 0x4, offset = 0x4, fixed_abs, tag = 'smem constant byte address 0x4 - core index']
  #allocation1 [shape = 'u32[72,128]{1,0:T(1,128)}', space=vmem, size = 0x9000, scoped, tag = 'internal scratch']
  #allocation2 [shape = 's32[1]{0}', space=sflag, size = 0x4, scoped, tag = 'scoped memory for tpu_custom_call.1']
  #allocation3 [shape = 'u8[512]{0}', space=smem, size = 0x200, scoped, tag = 'prefetched SMEM operand 0']
  %s0 = inlined_call_operand.hbm [shape: f32[4], index: 0, kind: input, shape index: {}]
  %s1 = inlined_call_operand.hbm [shape: f32[3,1024], index: 1, kind: input, shape index: {}]
  %s2 = inlined_call_operand.hbm [shape: f32[1,1024], index: 2, kind: output, shape index: {}]
  %s3 = sld [smem:[#allocation0]]
  $region41: #{tpu_custom_call.1} parent=0
    _
  %s5 = ssub.s32 1, %s3
  %s6 = scalar_select 0, %s5, %s3
  %s8 = sshll.u32 %s0, 4
  %s9 = int_to_ptr.hbm [resolvable:$true] %s8
  %11 = dma.hbm_to_smem %s9, 16, [#allocation3], [#allocation2]
  %13 = dma.done [#allocation2], 16
  %14 = sfence
  $region1: #{tpu_custom_call.1} parent=0
    #allocation4 [shape = 'u8[16384]{0}', space=vmem, size = 0x4000, scoped, tag = 'input window, operand 1']
    #allocation5 [shape = 's32[2]{0}', space=sflag, size = 0x8, scoped, tag = 'scoped memory for tpu_custom_call.1']
    #allocation6 [shape = 's32[2]{0}', space=sflag, size = 0x8, scoped, tag = 'scoped memory for tpu_custom_call.1']
    #allocation7 [shape = 'u8[4096]{0}', space=vmem, size = 0x1000, scoped, tag = 'output window, operand 0']
    %15 = vsyncpa [#allocation5], 0
    %s16 = scalar_lea.sflag [#allocation5], 1
    %17 = vsyncpa %s16, 0
    %18 = vsyncpa [#allocation6], 0
    %s19 = scalar_lea.sflag [#allocation6], 1
    %20 = vsyncpa %s19, 0
    loop: start=0, step=1, limit=4
    $region2: #{tpu_custom_call.1} parent=1 // loop_pre_header
      _
    $region3: #{tpu_custom_call.1} parent=1 // loop_header
      %s22 = sphi 0, %s26
      %p23 = scmp.ge.s32.totalorder %s22, 4
      %s32 = sphi 0, %s34
      %s35 = sphi 0, %s32
      %s36 = sphi 0, %s35
      %s52 = sphi 0, %s36
      %s58 = sphi 0, %s60
      %s61 = sphi 0, %s58
      %s62 = sphi 0, %s61
      %s78 = sphi 0, %s62
    $region4: #{tpu_custom_call.1} parent=1 // loop_header_branch
      %25 = sbr.rel (%p23) target = $region8
    $region5: #{tpu_custom_call.1} parent=1 // loop_body
      %s27 = ssub.s32 %s22, 1
      %s28 = ssub.s32 %s22, 2
      %s29 = sadd.s32 %s22, 1
      %s30 = ssub.s32 %s22, %s29
      %p31 = scmp.eq.s32.totalorder %s30, 0
      %s33 = sadd.s32 %s32, 1
      %s34 = scalar_select %p31, %s32, %s33
      %p37 = pneg %p31
      %p38 = scmp.eq.s32.totalorder %s22, 1
      %p39 = por %p37, %p38
      %p40 = scmp.ne.s32.totalorder %s32, %s35
      %p41 = scmp.eq.s32.totalorder %s22, 0
      %p42 = por %p40, %p41
      %p43 = scmp.ne.s32.totalorder %s32, %s35
      %p44 = scmp.eq.s32.totalorder %s27, 1
      %p45 = por %p43, %p44
      %p46 = scmp.ne.s32.totalorder %s35, %s36
      %p47 = scmp.eq.s32.totalorder %s27, 0
      %p48 = por %p46, %p47
      %p49 = scmp.ne.s32.totalorder %s35, %s36
      %p50 = scmp.eq.s32.totalorder %s28, 1
      %p51 = por %p49, %p50
      %p53 = scmp.ne.s32.totalorder %s36, %s52
      %p54 = scmp.eq.s32.totalorder %s28, 0
      %p55 = por %p53, %p54
      %s56 = ssub.s32 %s22, %s29
      %p57 = scmp.eq.s32.totalorder %s56, 0
      %s59 = sadd.s32 %s58, 1
      %s60 = scalar_select %p57, %s58, %s59
      %p63 = pneg %p57
      %p64 = scmp.eq.s32.totalorder %s22, 1
      %p65 = por %p63, %p64
      %p66 = scmp.ne.s32.totalorder %s58, %s61
      %p67 = scmp.eq.s32.totalorder %s22, 0
      %p68 = por %p66, %p67
      %p69 = scmp.ne.s32.totalorder %s58, %s61
      %p70 = scmp.eq.s32.totalorder %s27, 1
      %p71 = por %p69, %p70
      %p72 = scmp.ne.s32.totalorder %s61, %s62
      %p73 = scmp.eq.s32.totalorder %s27, 0
      %p74 = por %p72, %p73
      %p75 = scmp.ne.s32.totalorder %s61, %s62
      %p76 = scmp.eq.s32.totalorder %s28, 1
      %p77 = por %p75, %p76
      %p79 = scmp.ne.s32.totalorder %s62, %s78
      %p80 = scmp.eq.s32.totalorder %s28, 0
      %p81 = por %p79, %p80
      %p82 = scmp.le.s32.totalorder 1, %s22
      %p83 = scmp.lt.s32.totalorder %s22, 3
      %p84 = pnand %p82, %p83
      %p85 = pneg %p84
      // Predicated region
      $region9: #{tpu_custom_call.1} parent=5 // pred_check
        _
      $region10: #{tpu_custom_call.1} parent=5 // pred_check_branch
        %87 = sbr.rel (%p84) target = $region12
      $region11: #{tpu_custom_call.1} parent=5 // pred_region
        %s88 = ssub.s32 %s22, 1
      $region12: #{tpu_custom_call.1} parent=5 // pred_fallthru
        _
      %p89 = scmp.lt.s32.totalorder %s22, 2
      // Predicated region
      $region13: #{tpu_custom_call.1} parent=5 // pred_check
        %p90 = pneg %p89
      $region14: #{tpu_custom_call.1} parent=5 // pred_check_branch
        %92 = sbr.rel (%p90) target = $region16
      $region15: #{tpu_custom_call.1} parent=5 // pred_region
        // Predicated region
        $region17: #{tpu_custom_call.1} parent=15 // pred_check
          %p93 = pneg %p42
        $region18: #{tpu_custom_call.1} parent=15 // pred_check_branch
          %95 = sbr.rel (%p93) target = $region20
        $region19: #{tpu_custom_call.1} parent=15 // pred_region
          %s96 = sand.u32 %s32, 1
          %s97 = scalar_lea.sflag [#allocation5], %s96
          %s98 = sand.u32 %s32, 1
          %s99 = smul.addr %s98, 16
          %s100 = scalar_lea.vmem [#allocation4], %s99
          %s101 = smul.u32 4, %s22
          %103 = vsyncadd %s97, 0
          %s104 = smul.addr %s101, 4
          %s105 = scalar_lea.hbm %s1, %s104
          %s107 = sshll.u32 %s105, 4
          %s108 = int_to_ptr.hbm [resolvable:$true] %s107
          %s109 = sshll.u32 %s100, 4
          %s110 = int_to_ptr.vmem [resolvable:$true] %s109
          %112 = dma.hbm_to_vmem [thread:$0]  %s108, 256, %s110, %s97
        $region20: #{tpu_custom_call.1} parent=15 // pred_fallthru
          _
      $region16: #{tpu_custom_call.1} parent=5 // pred_fallthru
        _
      %p113 = scmp.le.s32.totalorder 1, %s22
      %p114 = scmp.lt.s32.totalorder %s22, 3
      %p115 = pnand %p113, %p114
      %p116 = pneg %p115
      // Predicated region
      $region21: #{tpu_custom_call.1} parent=5 // pred_check
        _
      $region22: #{tpu_custom_call.1} parent=5 // pred_check_branch
        %118 = sbr.rel (%p115) target = $region24
      $region23: #{tpu_custom_call.1} parent=5 // pred_region
        %s119 = ssub.s32 %s22, 1
        %s120 = sand.u32 %s35, 1
        %s121 = scalar_lea.sflag [#allocation5], %s120
        %s122 = sand.u32 %s35, 1
        %s123 = smul.addr %s122, 16
        %s124 = scalar_lea.vmem [#allocation4], %s123
        // Predicated region
        $region25: #{tpu_custom_call.1} parent=23 // pred_check
          %p125 = pneg %p48
        $region26: #{tpu_custom_call.1} parent=23 // pred_check_branch
          %127 = sbr.rel (%p125) target = $region28
        $region27: #{tpu_custom_call.1} parent=23 // pred_region
          %129 = dma.done %s121, 256
        $region28: #{tpu_custom_call.1} parent=23 // pred_fallthru
          _
        %s130 = sand.u32 %s35, 1
        %s131 = scalar_lea.sflag [#allocation5], %s130
        %s132 = sand.u32 %s35, 1
        %s133 = smul.addr %s132, 16
        %s134 = scalar_lea.vmem [#allocation4], %s133
        %p135 = pneg %p48
        %p136 = pneg %p45
        %p137 = pneg %p74
        %p138 = pneg %p71
        %s139 = sand.u32 %s61, 1
        %s140 = scalar_lea.sflag [#allocation6], %s139
        %s141 = sand.u32 %s61, 1
        %s142 = smul.addr %s141, 4
        %s143 = scalar_lea.vmem [#allocation7], %s142
        %s144 = smul.u32 4, %s27
        %s145 = smul.u32 4, %s27
        %s146 = sld [smem:[#allocation3]]
        %s147 = sld [smem:[#allocation3 + $0x1]]
        %s148 = sld [smem:[#allocation3 + $0x2]]
        %s149 = sld [smem:[#allocation3 + $0x3]]
        %v150 = vld [vmem:[%s124] ss:$4 sm:$0xf]
        %s151 = scalar_lea.vmem %s124, 1 [#allocation4]
        %v152 = vld [vmem:[%s151] ss:$4 sm:$0xf]
        %s153 = scalar_lea.vmem %s124, 2 [#allocation4]
        %v154 = vld [vmem:[%s153] ss:$4 sm:$0xf]
        %v155 = vstv %s146
        %v156 = vmul.f32 %v150, %v155
        %v157 = vstv %s147
        %v158 = vmul.f32 %v152, %v157
        %v159 = vadd.f32 %v156, %v158
        %v160 = vstv %s148
        %v161 = vmul.f32 %v154, %v160
        %v162 = vadd.f32 %v159, %v161
        %v163 = vstv %s149
        %v164 = vsub.f32 %v162, %v163
        %v165 = vrsqrt.pop %v164
        %v166 = vmul.f32 %v165, %v164
        %v167 = vmul.f32 %v166, %v165
        %v168 = vmul.f32 0.5, %v167
        %v169 = vsub.f32 1.5, %v168
        %v170 = vmul.f32 %v165, %v169
        %v171 = vmul.f32 %v164, %v170
        %vm172 = vcmp.eq.f32.partialorder %v164, inf
        %v173 = vsel %vm172, %v164, %v171
        %vm174 = vcmp.eq.f32.partialorder %v164, 0.0
        %v175 = vand.u32 %v164, 2147483648
        %v176 = vsel %vm174, %v175, %v173
        %v177 = vlaneseq
        %vm178 = vcmp.ge.s32.totalorder %v177, 0
        %vm179 = vcmp.lt.s32.totalorder %v177, 512
        %vm180 = vmand %vm178, %vm179
        %181 = vst.msk [vmem:[%s143] sm:$0xf] %vm180, %v176
        %s182 = sand.u32 %s61, 1
        %s183 = scalar_lea.sflag [#allocation6], %s182
        %s184 = sand.u32 %s61, 1
        %s185 = smul.addr %s184, 4
        %s186 = scalar_lea.vmem [#allocation7], %s185
        // Predicated region
        $region29: #{tpu_custom_call.1} parent=23 // pred_check
          %p187 = pneg %p71
        $region30: #{tpu_custom_call.1} parent=23 // pred_check_branch
          %189 = sbr.rel (%p187) target = $region32
        $region31: #{tpu_custom_call.1} parent=23 // pred_region
          %s190 = smul.u32 4, %s27
          %192 = vsyncadd %s183, 0
          %s193 = scalar_lea.hbm %s2, %s190
          %s195 = sshll.u32 %s186, 4
          %s196 = int_to_ptr.vmem [resolvable:$true] %s195
          %s197 = sshll.u32 %s193, 4
          %s198 = int_to_ptr.hbm [resolvable:$true] %s197
          %200 = dma.vmem_to_hbm [thread:$0]  %s196, 64, %s198, %s183
        $region32: #{tpu_custom_call.1} parent=23 // pred_fallthru
          _
      $region24: #{tpu_custom_call.1} parent=5 // pred_fallthru
        _
      %p201 = scmp.le.s32.totalorder 2, %s22
      // Predicated region
      $region33: #{tpu_custom_call.1} parent=5 // pred_check
        %p202 = pneg %p201
      $region34: #{tpu_custom_call.1} parent=5 // pred_check_branch
        %204 = sbr.rel (%p202) target = $region36
      $region35: #{tpu_custom_call.1} parent=5 // pred_region
        %s205 = ssub.s32 %s22, 2
        // Predicated region
        $region37: #{tpu_custom_call.1} parent=35 // pred_check
          %p206 = pneg %p77
        $region38: #{tpu_custom_call.1} parent=35 // pred_check_branch
          %208 = sbr.rel (%p206) target = $region40
        $region39: #{tpu_custom_call.1} parent=35 // pred_region
          %s209 = sand.u32 %s62, 1
          %s210 = scalar_lea.sflag [#allocation6], %s209
          %s211 = sand.u32 %s62, 1
          %s212 = smul.addr %s211, 4
          %s213 = scalar_lea.vmem [#allocation7], %s212
          %215 = dma.done %s210, 64
        $region40: #{tpu_custom_call.1} parent=35 // pred_fallthru
          _
      $region36: #{tpu_custom_call.1} parent=5 // pred_fallthru
        _
    $region6: #{tpu_custom_call.1} parent=1 // loop_footer
      %s26 = sadd.s32 1, %s22
    $region7: #{tpu_custom_call.1} parent=1 // loop_footer_branch
      %21 = sbr.rel target = $region3
    $region8: #{tpu_custom_call.1} parent=1 // loop_exit
      _
    %216 = vsyncpa [#allocation5], 1
    %s217 = scalar_lea.sflag [#allocation5], 1
    %218 = vsyncpa %s217, 1
    %219 = vsyncpa [#allocation6], 1
    %s220 = scalar_lea.sflag [#allocation6], 1
    %221 = vsyncpa %s220, 1

</llo_original>
